<compile_context>
chip_gen: v7x
topology: tpu7x:2x2x1
jax: 0.10.0
libtpu: 0.0.40
codegen_flags: <defaults>
</compile_context>

<pallas_src>
import jax
import jax.numpy as jnp
from jax.experimental import pallas as pl
from jax.experimental.pallas import tpu as pltpu


def _make_reg_l1_kernel(bt, total_rows, ragged):
    def kernel(o_ref, t_ref, m_ref, out_ref, num_acc, msum_acc):
        # o_ref / t_ref / m_ref: (bt, L) with L = K*D on the lane axis.
        i = pl.program_id(0)

        @pl.when(i == 0)
        def _init():
            num_acc[...] = jnp.zeros_like(num_acc)
            msum_acc[...] = jnp.zeros_like(msum_acc)

        o = o_ref[...].astype(jnp.float32)
        t = t_ref[...].astype(jnp.float32)
        m = m_ref[...].astype(jnp.float32)

        # |o*m - t*m| == |o - t| * m for the non-negative 0/1 mask.
        vals = jnp.abs(o - t) * m

        if ragged:
            # Last block may read past B; zero out the invalid rows (handles
            # arbitrary garbage, incl. NaN, via select rather than multiply).
            rows = jax.lax.broadcasted_iota(jnp.int32, o.shape, 0) + i * bt
            valid = rows < total_rows
            vals = jnp.where(valid, vals, 0.0)
            m = jnp.where(valid, m, 0.0)

        # Per-lane partials (cross-sublane reduce only) into resident scratch.
        num_acc[...] += jnp.sum(vals, axis=0, keepdims=True)
        msum_acc[...] += jnp.sum(m, axis=0, keepdims=True)

        @pl.when(i == pl.num_programs(0) - 1)
        def _finalize():
            num = jnp.sum(num_acc[...], axis=1, keepdims=True)            # (1, 1)
            den = jnp.sum(msum_acc[...], axis=1, keepdims=True) + jnp.float32(1e-4)
            out_ref[...] = num / den

    return kernel


def reg_l1_loss(output, mask, target, *, block_bytes_per_input=4 * 1024 * 1024):
    """output: (B, K, D), mask: (B, K) 0/1 float/bool, target: (B, K, D) -> scalar f32."""
    B, K, D = output.shape
    assert mask.shape == (B, K)
    assert target.shape == (B, K, D)

    L = K * D
    # Free row-major reshapes -- zero HBM traffic (unlike the old transposes).
    o2 = output.reshape(B, L)
    t2 = target.reshape(B, L)
    # Expanded mask stored compactly as bf16 (exact for 0/1 masks); it is the
    # only extra materialization and costs ~1/4 of one f32 input stream.
    m2 = jnp.broadcast_to(
        mask.astype(jnp.bfloat16)[:, :, None], (B, K, D)
    ).reshape(B, L)

    # Batch-tile rows against a per-input-block VMEM budget (last dim is the
    # full L; VMEM lane-pads it to a multiple of 128).
    lane_pad = ((L + 127) // 128) * 128
    bytes_per_row = lane_pad * 4                      # f32 working set per row
    max_rows = max(1, block_bytes_per_input // bytes_per_row)

    if B <= max_rows:
        bt, g, ragged = B, 1, False                   # single block (common case)
    else:
        bt = 0
        top = (max_rows // 8) * 8
        for cand in range(8, top + 1, 8):             # largest /8 divisor of B
            if B % cand == 0:
                bt = cand
        if bt:
            g, ragged = B // bt, False
        else:
            bt = max(8, top)                          # ragged tail, masked in-kernel
            g, ragged = (B + bt - 1) // bt, True

    out = pl.pallas_call(
        _make_reg_l1_kernel(bt, B, ragged),
        out_shape=jax.ShapeDtypeStruct((1, 1), jnp.float32),
        grid_spec=pltpu.PrefetchScalarGridSpec(
            num_scalar_prefetch=0,
            grid=(g,),
            in_specs=[
                pl.BlockSpec((bt, L), lambda i: (i, 0)),   # output (B, K*D)
                pl.BlockSpec((bt, L), lambda i: (i, 0)),   # target (B, K*D)
                pl.BlockSpec((bt, L), lambda i: (i, 0)),   # expanded mask (bf16)
            ],
            out_specs=pl.BlockSpec((1, 1), lambda i: (0, 0)),
            scratch_shapes=[
                pltpu.VMEM((1, L), jnp.float32),           # per-lane |o-t|*m partials
                pltpu.VMEM((1, L), jnp.float32),           # per-lane mask partials
            ],
        ),
        compiler_params=pltpu.CompilerParams(
            dimension_semantics=("arbitrary",),            # accumulator resident
            vmem_limit_bytes=32 * 1024 * 1024,
        ),
    )(o2, t2, m2)
    return out[0, 0]


def _reg_l1_loss_ref(output, mask, target):
    # Direct transcription of the PyTorch module.
    m = jnp.broadcast_to(mask.astype(jnp.float32)[:, :, None], output.shape)
    num = jnp.sum(jnp.abs(output * m - target * m))
    return num / (jnp.sum(m) + 0.0001)


if __name__ == "__main__":
    key = jax.random.PRNGKey(0)
    k1, k2, k3 = jax.random.split(key, 3)

    # CenterNet-ish small shapes: batch=4, max_objects=128, regression dim=2.
    B, K, D = 4, 128, 2
    output = jax.random.normal(k1, (B, K, D), dtype=jnp.float32)
    target = jax.random.normal(k2, (B, K, D), dtype=jnp.float32)
    mask = (jax.random.uniform(k3, (B, K)) > 0.5).astype(jnp.float32)

    loss = jax.block_until_ready(reg_l1_loss(output, mask, target))
    ref = jax.block_until_ready(_reg_l1_loss_ref(output, mask, target))

    assert jnp.allclose(loss, ref, rtol=1e-5, atol=1e-6), (loss, ref)
    print("KERNEL_OK")
</pallas_src>

<mosaic_0001>
module attributes {stable_mosaic.version = 11 : i64} {
  func.func @kernel(%arg0: i32, %arg1: memref<4x256xf32, #tpu.memory_space<vmem>>, %arg2: memref<4x256xf32, #tpu.memory_space<vmem>>, %arg3: memref<4x256xbf16, #tpu.memory_space<vmem>>, %arg4: memref<1x1xf32, #tpu.memory_space<vmem>>, %arg5: memref<1x256xf32, #tpu.memory_space<vmem>>, %arg6: memref<1x256xf32, #tpu.memory_space<vmem>>) attributes {dimension_semantics = [#tpu.dimension_semantics<arbitrary>], iteration_bounds = array<i64: 1>, scalar_prefetch = 0 : i64, scratch_operands = 2 : i64, tpu.core_type = #tpu.core_type<tc>, window_params = [{transform_indices = @transform_0, window_bounds = array<i64: 4, 256>}, {transform_indices = @transform_1, window_bounds = array<i64: 4, 256>}, {transform_indices = @transform_2, window_bounds = array<i64: 4, 256>}, {pipeline_mode = #tpu.pipeline_mode<synchronous>, transform_indices = @transform_3, window_bounds = array<i64: 1, 1>}]} {
    %c0_i32 = arith.constant 0 : i32
    %0 = arith.cmpi eq, %arg0, %c0_i32 : i32
    %1 = arith.extui %0 : i1 to i32
    %c0_i32_0 = arith.constant 0 : i32
    %2 = arith.cmpi ne, %1, %c0_i32_0 : i32
    scf.if %2 {
      %cst_17 = arith.constant 0.000000e+00 : f32
      %23 = vector.broadcast %cst_17 : f32 to vector<1x256xf32>
      %c0_18 = arith.constant 0 : index
      %c0_19 = arith.constant 0 : index
      %24 = vector.load %arg5[%c0_18, %c0_19] : memref<1x256xf32, #tpu.memory_space<vmem>>, vector<1x256xf32>
      tpu.vector_store %arg5[%c0_18, %c0_19], %23 {strides = array<i32>} : memref<1x256xf32, #tpu.memory_space<vmem>>, vector<1x256xf32>,
      %cst_20 = arith.constant 0.000000e+00 : f32
      %25 = vector.broadcast %cst_20 : f32 to vector<1x256xf32>
      %c0_21 = arith.constant 0 : index
      %c0_22 = arith.constant 0 : index
      %26 = vector.load %arg6[%c0_21, %c0_22] : memref<1x256xf32, #tpu.memory_space<vmem>>, vector<1x256xf32>
      tpu.vector_store %arg6[%c0_21, %c0_22], %25 {strides = array<i32>} : memref<1x256xf32, #tpu.memory_space<vmem>>, vector<1x256xf32>,
    } else {
    }
    %c0 = arith.constant 0 : index
    %c0_1 = arith.constant 0 : index
    %3 = vector.load %arg1[%c0, %c0_1] : memref<4x256xf32, #tpu.memory_space<vmem>>, vector<4x256xf32>
    %c0_2 = arith.constant 0 : index
    %c0_3 = arith.constant 0 : index
    %4 = vector.load %arg2[%c0_2, %c0_3] : memref<4x256xf32, #tpu.memory_space<vmem>>, vector<4x256xf32>
    %c0_4 = arith.constant 0 : index
    %c0_5 = arith.constant 0 : index
    %5 = vector.load %arg3[%c0_4, %c0_5] : memref<4x256xbf16, #tpu.memory_space<vmem>>, vector<4x256xbf16>
    %6 = arith.extf %5 : vector<4x256xbf16> to vector<4x256xf32>
    %7 = arith.subf %3, %4 : vector<4x256xf32>
    %8 = math.absf %7 : vector<4x256xf32>
    %9 = arith.mulf %8, %6 : vector<4x256xf32>
    %c0_6 = arith.constant 0 : index
    %c0_7 = arith.constant 0 : index
    %10 = vector.load %arg5[%c0_6, %c0_7] : memref<1x256xf32, #tpu.memory_space<vmem>>, vector<1x256xf32>
    %cst = arith.constant dense<0.000000e+00> : vector<256xf32>
    %11 = vector.multi_reduction <add>, %9, %cst [0] : vector<4x256xf32> to vector<256xf32>
    %12 = vector.shape_cast %11 : vector<256xf32> to vector<1x256xf32>
    %13 = arith.addf %10, %12 : vector<1x256xf32>
    %c0_8 = arith.constant 0 : index
    %c0_9 = arith.constant 0 : index
    %14 = vector.load %arg5[%c0_8, %c0_9] : memref<1x256xf32, #tpu.memory_space<vmem>>, vector<1x256xf32>
    tpu.vector_store %arg5[%c0_8, %c0_9], %13 {strides = array<i32>} : memref<1x256xf32, #tpu.memory_space<vmem>>, vector<1x256xf32>,
    %c0_10 = arith.constant 0 : index
    %c0_11 = arith.constant 0 : index
    %15 = vector.load %arg6[%c0_10, %c0_11] : memref<1x256xf32, #tpu.memory_space<vmem>>, vector<1x256xf32>
    %cst_12 = arith.constant dense<0.000000e+00> : vector<256xf32>
    %16 = vector.multi_reduction <add>, %6, %cst_12 [0] : vector<4x256xf32> to vector<256xf32>
    %17 = vector.shape_cast %16 : vector<256xf32> to vector<1x256xf32>
    %18 = arith.addf %15, %17 : vector<1x256xf32>
    %c0_13 = arith.constant 0 : index
    %c0_14 = arith.constant 0 : index
    %19 = vector.load %arg6[%c0_13, %c0_14] : memref<1x256xf32, #tpu.memory_space<vmem>>, vector<1x256xf32>
    tpu.vector_store %arg6[%c0_13, %c0_14], %18 {strides = array<i32>} : memref<1x256xf32, #tpu.memory_space<vmem>>, vector<1x256xf32>,
    %c0_i32_15 = arith.constant 0 : i32
    %20 = arith.cmpi eq, %arg0, %c0_i32_15 : i32
    %21 = arith.extui %20 : i1 to i32
    %c0_i32_16 = arith.constant 0 : i32
    %22 = arith.cmpi ne, %21, %c0_i32_16 : i32
    scf.if %22 {
      %c0_17 = arith.constant 0 : index
      %c0_18 = arith.constant 0 : index
      %23 = vector.load %arg5[%c0_17, %c0_18] : memref<1x256xf32, #tpu.memory_space<vmem>>, vector<1x256xf32>
      %cst_19 = arith.constant dense<0.000000e+00> : vector<1xf32>
      %24 = vector.multi_reduction <add>, %23, %cst_19 [1] : vector<1x256xf32> to vector<1xf32>
      %25 = vector.shape_cast %24 : vector<1xf32> to vector<1x1xf32>
      %c0_20 = arith.constant 0 : index
      %c0_21 = arith.constant 0 : index
      %26 = vector.load %arg6[%c0_20, %c0_21] : memref<1x256xf32, #tpu.memory_space<vmem>>, vector<1x256xf32>
      %cst_22 = arith.constant dense<0.000000e+00> : vector<1xf32>
      %27 = vector.multi_reduction <add>, %26, %cst_22 [1] : vector<1x256xf32> to vector<1xf32>
      %28 = vector.shape_cast %27 : vector<1xf32> to vector<1x1xf32>
      %cst_23 = arith.constant 9.99999974E-5 : f32
      %29 = vector.broadcast %cst_23 : f32 to vector<1x1xf32>
      %30 = arith.addf %28, %29 : vector<1x1xf32>
      %31 = arith.divf %25, %30 : vector<1x1xf32>
      %c0_24 = arith.constant 0 : index
      %c0_25 = arith.constant 0 : index
      %32 = vector.load %arg4[%c0_24, %c0_25] : memref<1x1xf32, #tpu.memory_space<vmem>>, vector<1x1xf32>
      tpu.vector_store %arg4[%c0_24, %c0_25], %31 {strides = array<i32>} : memref<1x1xf32, #tpu.memory_space<vmem>>, vector<1x1xf32>,
    } else {
    }
    return
  }
  func.func @transform_0(%arg0: i32) -> (i32, i32) {
    %c0_i32 = arith.constant 0 : i32
    %c0_i32_0 = arith.constant 0 : i32
    return %arg0, %c0_i32 : i32, i32
  }
  func.func @transform_1(%arg0: i32) -> (i32, i32) {
    %c0_i32 = arith.constant 0 : i32
    %c0_i32_0 = arith.constant 0 : i32
    return %arg0, %c0_i32 : i32, i32
  }
  func.func @transform_2(%arg0: i32) -> (i32, i32) {
    %c0_i32 = arith.constant 0 : i32
    %c0_i32_0 = arith.constant 0 : i32
    return %arg0, %c0_i32 : i32, i32
  }
  func.func @transform_3(%arg0: i32) -> (i32, i32) {
    %c0_i32 = arith.constant 0 : i32
    %c0_i32_0 = arith.constant 0 : i32
    %c0_i32_1 = arith.constant 0 : i32
    return %c0_i32, %c0_i32_0 : i32, i32
  }
}

</mosaic_0001>

<llo_original>
// kernel: tpu_custom_call.1
$region0: #{tpu_custom_call.1}
  #allocation0 [shape = 'u32[]', space=smem, size = 0x4, offset = 0x4, fixed_abs, tag = 'smem constant byte address 0x4 - core index']
  #allocation1 [shape = 'u32[144,128]{1,0:T(1,128)}', space=vmem, size = 0x12000, scoped, tag = 'internal scratch']
  #allocation2 [shape = 'f32[1,256]{1,0:T(1,128)}', space=vmem, size = 0x400, scoped, tag = 'scratch operand']
  #allocation3 [shape = 'f32[1,256]{1,0:T(1,128)}', space=vmem, size = 0x400, scoped, tag = 'scratch operand']
  %s0 = inlined_call_operand.hbm [shape: f32[4,256], index: 0, kind: input, shape index: {}]
  %s1 = inlined_call_operand.hbm [shape: f32[4,256], index: 1, kind: input, shape index: {}]
  %s2 = inlined_call_operand.vmem [shape: bf16[4,256], index: 2, kind: input, shape index: {}]
  %s3 = inlined_call_operand.hbm [shape: f32[1,1], index: 3, kind: output, shape index: {}]
  %s4 = sld [smem:[#allocation0]]
  $region38: #{tpu_custom_call.1} parent=0
    _
  %s6 = ssub.s32 1, %s4
  %s7 = scalar_select 0, %s6, %s4
  $region1: #{tpu_custom_call.1} parent=0
    #allocation4 [shape = 'u8[4096]{0}', space=vmem, size = 0x1000, scoped, tag = 'input window, operand 0, single buffered']
    #allocation5 [shape = 's32[1]{0}', space=sflag, size = 0x4, scoped, tag = 'scoped memory for tpu_custom_call.1']
    #allocation6 [shape = 's32[1]{0}', space=sflag, size = 0x4, scoped, tag = 'scoped memory for tpu_custom_call.1']
    #allocation7 [shape = 'u8[4096]{0}', space=vmem, size = 0x1000, scoped, tag = 'input window, operand 1, single buffered']
    #allocation8 [shape = 's32[1]{0}', space=sflag, size = 0x4, scoped, tag = 'scoped memory for tpu_custom_call.1']
    #allocation9 [shape = 'u8[512]{0}', space=vmem, size = 0x400, scoped, tag = 'output window, operand 0, single buffered']
    %8 = vsyncpa [#allocation5], 0
    %9 = vsyncpa [#allocation8], 0
    %10 = vsyncpa [#allocation6], 0
    // Predicated region
    $region2: #{tpu_custom_call.1} parent=1 // pred_check
      _
    $region3: #{tpu_custom_call.1} parent=1 // pred_check_branch
      %12 = sbr.rel (0) target = $region5
    $region4: #{tpu_custom_call.1} parent=1 // pred_region
      %s14 = ssub.s32 128, 128
      %15 = vsyncadd [#allocation5], %s14
      %s17 = sshll.u32 [#allocation4], 4
      %s18 = int_to_ptr.vmem [resolvable:$true] %s17
      %20 = dma.hbm_to_vmem [thread:$0]  %s0, 128, %s18, [#allocation5]
    $region5: #{tpu_custom_call.1} parent=1 // pred_fallthru
      _
    // Predicated region
    $region6: #{tpu_custom_call.1} parent=1 // pred_check
      _
    $region7: #{tpu_custom_call.1} parent=1 // pred_check_branch
      %22 = sbr.rel (0) target = $region9
    $region8: #{tpu_custom_call.1} parent=1 // pred_region
      %s24 = ssub.s32 128, 128
      %25 = vsyncadd [#allocation8], %s24
      %s27 = sshll.u32 [#allocation7], 4
      %s28 = int_to_ptr.vmem [resolvable:$true] %s27
      %30 = dma.hbm_to_vmem [thread:$0]  %s1, 128, %s28, [#allocation8]
    $region9: #{tpu_custom_call.1} parent=1 // pred_fallthru
      _
    // Predicated region
    $region10: #{tpu_custom_call.1} parent=1 // pred_check
      _
    $region11: #{tpu_custom_call.1} parent=1 // pred_check_branch
      %32 = sbr.rel (0) target = $region13
    $region12: #{tpu_custom_call.1} parent=1 // pred_region
      _
    $region13: #{tpu_custom_call.1} parent=1 // pred_fallthru
      _
    // Predicated region
    $region14: #{tpu_custom_call.1} parent=1 // pred_check
      _
    $region15: #{tpu_custom_call.1} parent=1 // pred_check_branch
      %34 = sbr.rel (0) target = $region17
    $region16: #{tpu_custom_call.1} parent=1 // pred_region
      %35 = dma.done [#allocation5], 128
    $region17: #{tpu_custom_call.1} parent=1 // pred_fallthru
      _
    // Predicated region
    $region18: #{tpu_custom_call.1} parent=1 // pred_check
      _
    $region19: #{tpu_custom_call.1} parent=1 // pred_check_branch
      %37 = sbr.rel (0) target = $region21
    $region20: #{tpu_custom_call.1} parent=1 // pred_region
      %38 = dma.done [#allocation8], 128
    $region21: #{tpu_custom_call.1} parent=1 // pred_fallthru
      _
    %p39 = scmp.eq.s32.totalorder 0, 0
    // Predicated region
    $region22: #{tpu_custom_call.1} parent=1 // pred_check
      %p40 = pneg %p39
    $region23: #{tpu_custom_call.1} parent=1 // pred_check_branch
      %42 = sbr.rel (%p40) target = $region25
    $region24: #{tpu_custom_call.1} parent=1 // pred_region
      %v43 = vlaneseq
      %vm44 = vcmp.ge.s32.totalorder %v43, 0
      %vm45 = vcmp.lt.s32.totalorder %v43, 256
      %vm46 = vmand %vm44, %vm45
      %47 = vst.msk [vmem:[#allocation2] sm:$0x3] %vm46, 0.0
      %48 = vst.msk [vmem:[#allocation3] sm:$0x3] %vm46, 0.0
    $region25: #{tpu_custom_call.1} parent=1 // pred_fallthru
      _
    %v49 = vld [vmem:[#allocation4] sm:$0xff]
    %v50 = vld [vmem:[#allocation7] sm:$0xff]
    %v51 = vld [vmem:[%s2] sm:$0xf]
    %v52 = vunpack.c.l.bf16 %v51
    %v53 = vsub.f32 %v49, %v50
    %v54 = vand.u32 2147483647, %v53
    %v55 = vmul.f32 %v54, %v52
    %v56 = vld [vmem:[#allocation2] sm:$0x3]
    %v58 = vcombine.high %v55, %v55
    %vm60 = vcmask 1043456
    %v61 = vsel %vm60, %v55, 0.0
    %v62 = vrot.slane %v61, 4
    %v63 = vadd.f32 %v61, %v62
    %v64 = vrot.slane %v63, 2
    %v65 = vadd.f32 %v63, %v64
    %v66 = vrot.slane %v65, 1
    %v67 = vadd.f32 %v65, %v66
    %v68 = vsel %vm60, %v58, 0.0
    %v69 = vrot.slane %v68, 4
    %v70 = vadd.f32 %v68, %v69
    %v71 = vrot.slane %v70, 2
    %v72 = vadd.f32 %v70, %v71
    %v73 = vrot.slane %v72, 1
    %v74 = vadd.f32 %v72, %v73
    %v77 = vcombine.low %v67, %v74
    %v79 = vunpack.c.l.s4 1966171168
    %v80 = vunpack.c.0.s8 %v79
    %v81 = vlaneseq
    %v82 = vshrl.u32 %v81, 7
    %v83 = vsub.s32 %v80, %v82
    %v84 = vrot.slane %v77, %v83
    %v86 = vunpack.c.l.s4 1966171168
    %v87 = vunpack.c.0.s8 %v86
    %v88 = vlaneseq
    %v89 = vshrl.u32 %v88, 7
    %v90 = vsub.s32 %v87, %v89
    %v91 = vrot.slane %v84, %v90
    %v93 = vadd.f32 %v56, %v91
    %v94 = vlaneseq
    %vm95 = vcmp.ge.s32.totalorder %v94, 0
    %vm96 = vcmp.lt.s32.totalorder %v94, 256
    %vm97 = vmand %vm95, %vm96
    %98 = vst.msk [vmem:[#allocation2] sm:$0x3] %vm97, %v93
    %v99 = vld [vmem:[#allocation3] sm:$0x3]
    %v101 = vcombine.high %v52, %v52
    %v103 = vsel %vm60, %v52, 0.0
    %v104 = vrot.slane %v103, 4
    %v105 = vadd.f32 %v103, %v104
    %v106 = vrot.slane %v105, 2
    %v107 = vadd.f32 %v105, %v106
    %v108 = vrot.slane %v107, 1
    %v109 = vadd.f32 %v107, %v108
    %v110 = vsel %vm60, %v101, 0.0
    %v111 = vrot.slane %v110, 4
    %v112 = vadd.f32 %v110, %v111
    %v113 = vrot.slane %v112, 2
    %v114 = vadd.f32 %v112, %v113
    %v115 = vrot.slane %v114, 1
    %v116 = vadd.f32 %v114, %v115
    %v119 = vcombine.low %v109, %v116
    %v121 = vunpack.c.l.s4 1966171168
    %v122 = vunpack.c.0.s8 %v121
    %v123 = vlaneseq
    %v124 = vshrl.u32 %v123, 7
    %v125 = vsub.s32 %v122, %v124
    %v126 = vrot.slane %v119, %v125
    %v128 = vunpack.c.l.s4 1966171168
    %v129 = vunpack.c.0.s8 %v128
    %v130 = vlaneseq
    %v131 = vshrl.u32 %v130, 7
    %v132 = vsub.s32 %v129, %v131
    %v133 = vrot.slane %v126, %v132
    %v135 = vadd.f32 %v99, %v133
    %136 = vst.msk [vmem:[#allocation3] sm:$0x3] %vm97, %v135
    // Predicated region
    $region26: #{tpu_custom_call.1} parent=1 // pred_check
      %p137 = pneg %p39
    $region27: #{tpu_custom_call.1} parent=1 // pred_check_branch
      %139 = sbr.rel (%p137) target = $region29
    $region28: #{tpu_custom_call.1} parent=1 // pred_region
      %v140 = vld [vmem:[#allocation2] sm:$0x3]
      %v142 = vlaneseq
      %v143 = vshrl.u32 %v142, 7
      %v144 = vsub.s32 0, %v143
      %v145 = vrot.slane %v140, %v144
      %v146 = vlaneseq
      %v147 = vshrl.u32 %v146, 7
      %v148 = vsub.s32 1, %v147
      %v149 = vrot.slane %v140, %v148
      %vm152 = vcmask 1040384
      %v153 = vsel %vm152, %v145, 0.0
      %v154 = vsel %vm152, %v149, 0.0
      %v155 = vadd.f32 %v153, %v154
      %156 = vadd.xlane.f32.xlu0 %v155
      %v157 = vpop.xlane.xlu0 %156
      %v158 = vld [vmem:[#allocation3] sm:$0x3]
      %v160 = vlaneseq
      %v161 = vshrl.u32 %v160, 7
      %v162 = vsub.s32 0, %v161
      %v163 = vrot.slane %v158, %v162
      %v164 = vlaneseq
      %v165 = vshrl.u32 %v164, 7
      %v166 = vsub.s32 1, %v165
      %v167 = vrot.slane %v158, %v166
      %v170 = vsel %vm152, %v163, 0.0
      %v171 = vsel %vm152, %v167, 0.0
      %v172 = vadd.f32 %v170, %v171
      %173 = vadd.xlane.f32.xlu0 %v172
      %v174 = vpop.xlane.xlu0 %173
      %v175 = vadd.f32 %v174, 0.0001
      %v176 = vrcp.pop %v175
      %v177 = vmul.f32 %v157, %v176
      %vm178 = vcmask 0
      %179 = vst.msk [vmem:[#allocation9] sm:$0x1] %vm178, %v177
    $region29: #{tpu_custom_call.1} parent=1 // pred_fallthru
      _
    // Predicated region
    $region30: #{tpu_custom_call.1} parent=1 // pred_check
      _
    $region31: #{tpu_custom_call.1} parent=1 // pred_check_branch
      %181 = sbr.rel (0) target = $region33
    $region32: #{tpu_custom_call.1} parent=1 // pred_region
      %s183 = ssub.s32 16, 16
      %184 = vsyncadd [#allocation6], %s183
      %s186 = sshll.u32 [#allocation9], 4
      %s187 = int_to_ptr.vmem [resolvable:$true] %s186
      %189 = dma.vmem_to_hbm [thread:$0]  %s187, 16, %s3, [#allocation6]
    $region33: #{tpu_custom_call.1} parent=1 // pred_fallthru
      _
    // Predicated region
    $region34: #{tpu_custom_call.1} parent=1 // pred_check
      _
    $region35: #{tpu_custom_call.1} parent=1 // pred_check_branch
      %191 = sbr.rel (0) target = $region37
    $region36: #{tpu_custom_call.1} parent=1 // pred_region
      %192 = dma.done [#allocation6], 16
    $region37: #{tpu_custom_call.1} parent=1 // pred_fallthru
      _
    %193 = vsyncpa [#allocation5], 1
    %194 = vsyncpa [#allocation8], 1
    %195 = vsyncpa [#allocation6], 1

</llo_original>
